<compile_context>
chip_gen: v7x
topology: tpu7x:2x2x1
jax: 0.10.0
libtpu: 0.0.40
codegen_flags: <defaults>
</compile_context>

<pallas_src>
import functools

import jax
import jax.numpy as jnp
from jax.experimental import pallas as pl
from jax.experimental.pallas import tpu as pltpu


def _round_up(x: int, m: int) -> int:
    return ((x + m - 1) // m) * m


def _pick_tile(dim: int, pref: int, align: int) -> int:
    """Tile for `dim`: whole (aligned) dim if small, else `pref`, preferring
    an exact divisor (>= pref // 2) so we avoid a pad + trailing-slice pass."""
    if dim <= pref:
        return _round_up(dim, align)
    if dim % pref == 0:
        return pref
    for t in range(pref - align, max(pref // 2, align) - 1, -align):
        if dim % t == 0:
            return t
    return pref


def _bmm_nbm_kernel(a_ref, b_ref, o_ref, acc_ref):
    """One (tn, tm) tile of out[n, b, m] = sum_k x1[k, m, b] * x2[b, k, n].

    a_ref:   (1, tk, tm)  tile of x1 laid out as (B, K, M)
    b_ref:   (1, tk, tn)  tile of x2 laid out as (B, K, N)
    o_ref:   (tn, tm)     output tile of the (Np, B*Mp) result, whose column
                          block index is b * (Mp // tm) + m  ((N, B, M) flat)
    acc_ref: (tn, tm)     float32 accumulator scratch, resident across k
    """
    k = pl.program_id(3)

    @pl.when(k == 0)
    def _init():
        acc_ref[...] = jnp.zeros_like(acc_ref)

    # Contract K (dim 0 of both operands): the MXU result lands directly in
    # (tn, tm) = (N, M) orientation, so no output transpose pass is needed.
    acc_ref[...] += jax.lax.dot_general(
        b_ref[0], a_ref[0],
        dimension_numbers=(((0,), (0,)), ((), ())),
        preferred_element_type=jnp.float32,
    )

    @pl.when(k == pl.num_programs(3) - 1)
    def _write():
        o_ref[...] = acc_ref[...].astype(o_ref.dtype)


def bmm_transposed(x1, x2, *, tm=512, tn=512, tk=512, compute_dtype=None):
    """out[n, b, m] = sum_a x1[a, m, b] * x2[b, a, n]  (fused bmm + permutes).

    x1: (A, M, B)   x2: (B, A, N)   ->   (N, B, M)

    compute_dtype: optionally cast MXU inputs once in the wrapper (e.g.
    jnp.bfloat16 — recommended on v5e); accumulation stays float32.
    """
    A, M, B = x1.shape
    Bb, Ab, N = x2.shape
    assert B == Bb and A == Ab, (x1.shape, x2.shape)
    K = A
    out_dtype = jnp.result_type(x1.dtype, x2.dtype)

    k_align = 16 if compute_dtype == jnp.bfloat16 else 8
    tm = _pick_tile(M, tm, 128)
    tn = _pick_tile(N, tn, 128)
    tk = _pick_tile(K, tk, k_align)
    Mp, Np, Kp = _round_up(M, tm), _round_up(N, tn), _round_up(K, tk)

    # v7x megacore: ensure >= 2 blocks along the parallel grid axes when the
    # problem allows it, so both TensorCores get work.
    while (Np // tn) * (Mp // tm) * B < 2:
        if tn > 128:
            tn = max(128, ((tn // 2) // 128) * 128)
            Np = _round_up(N, tn)
        elif tm > 128:
            tm = max(128, ((tm // 2) // 128) * 128)
            Mp = _round_up(M, tm)
        else:
            break

    # Glue (fused by XLA into one pass over each operand): x1 (A, M, B) ->
    # (B, K, M) so per-batch tiles are lane-dense in M; optional single bf16
    # cast; zero-pad up to the tile grid only when needed.
    a = jnp.transpose(x1, (2, 0, 1))           # (B, K, M)
    b = x2                                     # (B, K, N)
    if compute_dtype is not None:
        a = a.astype(compute_dtype)
        b = b.astype(compute_dtype)
    if (Kp, Mp) != (K, M):
        a = jnp.pad(a, ((0, 0), (0, Kp - K), (0, Mp - M)))
    if (Kp, Np) != (K, N):
        b = jnp.pad(b, ((0, 0), (0, Kp - K), (0, Np - N)))

    grid = (Np // tn, Mp // tm, B, Kp // tk)   # reduction (K) innermost
    m_blocks = Mp // tm

    # VMEM budget from the actual block footprint (+ headroom) instead of a
    # blanket limit; keeps v7x's 64 MiB physical VMEM safe with default tiles.
    in_item = jnp.dtype(a.dtype).itemsize
    out_item = jnp.dtype(out_dtype).itemsize
    block_bytes = (2 * tk * (tm + tn) * in_item    # double-buffered inputs
                   + 2 * tn * tm * out_item        # double-buffered output
                   + tn * tm * 4)                  # f32 accumulator scratch
    vmem_limit = int(min(2 * block_bytes + (8 << 20), 100 << 20))

    # Advisory cost: a is re-streamed once per N-tile, b once per M-tile.
    flops = 2 * B * Mp * Np * Kp
    bytes_accessed = int(a.size * in_item * (Np // tn)
                         + b.size * in_item * m_blocks
                         + Np * B * Mp * out_item)

    out2d = pl.pallas_call(
        _bmm_nbm_kernel,
        out_shape=jax.ShapeDtypeStruct((Np, B * Mp), out_dtype),
        grid_spec=pltpu.PrefetchScalarGridSpec(
            num_scalar_prefetch=0,
            grid=grid,
            in_specs=[
                pl.BlockSpec((1, tk, tm), lambda n, m, bb, k: (bb, k, m)),
                pl.BlockSpec((1, tk, tn), lambda n, m, bb, k: (bb, k, n)),
            ],
            # Each (n, m, b) grid point owns its own lane-dense (tn, tm)
            # output block: the 2D columns are (B, M) flattened.
            out_specs=pl.BlockSpec(
                (tn, tm), lambda n, m, bb, k: (n, bb * m_blocks + m)),
            scratch_shapes=[pltpu.VMEM((tn, tm), jnp.float32)],
        ),
        compiler_params=pltpu.CompilerParams(
            dimension_semantics=("parallel", "parallel", "parallel",
                                 "arbitrary"),
            vmem_limit_bytes=vmem_limit,
        ),
        cost_estimate=pl.CostEstimate(
            flops=flops, transcendentals=0, bytes_accessed=bytes_accessed),
    )(a, b)

    out = out2d.reshape(Np, B, Mp)             # layout no-op (split last dim)
    if (Np, Mp) != (N, M):
        out = out[:N, :, :M]
    return out


def model_forward(x1, x2, **kwargs):
    """Matches Model.forward: permute(2,1,0) -> bmm -> permute(2,0,1)."""
    return bmm_transposed(x1, x2, **kwargs)


if __name__ == "__main__":
    key = jax.random.PRNGKey(0)
    k1, k2, k3, k4 = jax.random.split(key, 4)

    # Case 1: multi-tile path (grid = (2, 2, 2, 2)), no padding needed.
    A, M, B, N = 256, 256, 2, 256
    x1 = jax.random.normal(k1, (A, M, B), dtype=jnp.float32)
    x2 = jax.random.normal(k2, (B, A, N), dtype=jnp.float32)
    fwd = jax.jit(functools.partial(model_forward, tm=128, tn=128, tk=128))
    out = jax.block_until_ready(fwd(x1, x2))
    ref = jnp.einsum("amb,ban->nbm", x1, x2,
                     precision=jax.lax.Precision.HIGHEST)
    assert out.shape == (N, B, M), out.shape
    assert jnp.allclose(out, ref, rtol=2e-2, atol=5e-1), \
        float(jnp.max(jnp.abs(out - ref)))

    # Case 2: tiny unaligned shapes (exercise padding + trailing slice),
    # mirroring the original module's small-tensor contract.
    A2, M2, B2, N2 = 3, 5, 2, 7
    y1 = jax.random.normal(k3, (A2, M2, B2), dtype=jnp.float32)
    y2 = jax.random.normal(k4, (B2, A2, N2), dtype=jnp.float32)
    out2 = jax.block_until_ready(jax.jit(model_forward)(y1, y2))
    ref2 = jnp.einsum("amb,ban->nbm", y1, y2,
                      precision=jax.lax.Precision.HIGHEST)
    assert out2.shape == (N2, B2, M2), out2.shape
    assert jnp.allclose(out2, ref2, rtol=2e-2, atol=1e-1), \
        float(jnp.max(jnp.abs(out2 - ref2)))

    print("KERNEL_OK")
</pallas_src>

<mosaic_0001>
module attributes {stable_mosaic.version = 11 : i64} {
  func.func @_bmm_nbm_kernel(%arg0: i32, %arg1: i32, %arg2: i32, %arg3: i32, %arg4: memref<1x128x128xf32, #tpu.memory_space<vmem>>, %arg5: memref<1x128x128xf32, #tpu.memory_space<vmem>>, %arg6: memref<128x128xf32, #tpu.memory_space<vmem>>, %arg7: memref<128x128xf32, #tpu.memory_space<vmem>>) attributes {dimension_semantics = [#tpu.dimension_semantics<parallel>, #tpu.dimension_semantics<parallel>, #tpu.dimension_semantics<parallel>, #tpu.dimension_semantics<arbitrary>], iteration_bounds = array<i64: 2, 2, 2, 2>, scalar_prefetch = 0 : i64, scratch_operands = 1 : i64, tpu.core_type = #tpu.core_type<tc>, window_params = [{transform_indices = @transform_0, window_bounds = array<i64: 1, 128, 128>}, {transform_indices = @transform_1, window_bounds = array<i64: 1, 128, 128>}, {transform_indices = @transform_2, window_bounds = array<i64: 128, 128>}]} {
    %c0_i32 = arith.constant 0 : i32
    %0 = arith.cmpi eq, %arg3, %c0_i32 : i32
    %1 = arith.extui %0 : i1 to i32
    %c0_i32_0 = arith.constant 0 : i32
    %2 = arith.cmpi ne, %1, %c0_i32_0 : i32
    scf.if %2 {
      %cst_11 = arith.constant 0.000000e+00 : f32
      %14 = vector.broadcast %cst_11 : f32 to vector<128x128xf32>
      %c0_12 = arith.constant 0 : index
      %c0_13 = arith.constant 0 : index
      %15 = vector.load %arg7[%c0_12, %c0_13] : memref<128x128xf32, #tpu.memory_space<vmem>>, vector<128x128xf32>
      tpu.vector_store %arg7[%c0_12, %c0_13], %14 {strides = array<i32>} : memref<128x128xf32, #tpu.memory_space<vmem>>, vector<128x128xf32>,
    } else {
    }
    %c0 = arith.constant 0 : index
    %c0_1 = arith.constant 0 : index
    %3 = vector.load %arg7[%c0, %c0_1] : memref<128x128xf32, #tpu.memory_space<vmem>>, vector<128x128xf32>
    %c0_2 = arith.constant 0 : index
    %c0_3 = arith.constant 0 : index
    %c0_4 = arith.constant 0 : index
    %4 = vector.load %arg5[%c0_2, %c0_3, %c0_4] : memref<1x128x128xf32, #tpu.memory_space<vmem>>, vector<1x128x128xf32>
    %5 = vector.shape_cast %4 : vector<1x128x128xf32> to vector<128x128xf32>
    %c0_5 = arith.constant 0 : index
    %c0_6 = arith.constant 0 : index
    %c0_7 = arith.constant 0 : index
    %6 = vector.load %arg4[%c0_5, %c0_6, %c0_7] : memref<1x128x128xf32, #tpu.memory_space<vmem>>, vector<1x128x128xf32>
    %7 = vector.shape_cast %6 : vector<1x128x128xf32> to vector<128x128xf32>
    %cst = arith.constant dense<0.000000e+00> : vector<128x128xf32>
    %8 = tpu.matmul %5, %7, %cst {dimension_numbers = #tpu.dot_dimension_numbers<[0], [0], [1], [1], [0, 1, 1, 1], [], []>} : vector<128x128xf32>, vector<128x128xf32>, vector<128x128xf32> -> vector<128x128xf32>
    %9 = arith.addf %3, %8 : vector<128x128xf32>
    %c0_8 = arith.constant 0 : index
    %c0_9 = arith.constant 0 : index
    %10 = vector.load %arg7[%c0_8, %c0_9] : memref<128x128xf32, #tpu.memory_space<vmem>>, vector<128x128xf32>
    tpu.vector_store %arg7[%c0_8, %c0_9], %9 {strides = array<i32>} : memref<128x128xf32, #tpu.memory_space<vmem>>, vector<128x128xf32>,
    %c1_i32 = arith.constant 1 : i32
    %11 = arith.cmpi eq, %arg3, %c1_i32 : i32
    %12 = arith.extui %11 : i1 to i32
    %c0_i32_10 = arith.constant 0 : i32
    %13 = arith.cmpi ne, %12, %c0_i32_10 : i32
    scf.if %13 {
      %c0_11 = arith.constant 0 : index
      %c0_12 = arith.constant 0 : index
      %14 = vector.load %arg7[%c0_11, %c0_12] : memref<128x128xf32, #tpu.memory_space<vmem>>, vector<128x128xf32>
      %c0_13 = arith.constant 0 : index
      %c0_14 = arith.constant 0 : index
      %15 = vector.load %arg6[%c0_13, %c0_14] : memref<128x128xf32, #tpu.memory_space<vmem>>, vector<128x128xf32>
      tpu.vector_store %arg6[%c0_13, %c0_14], %14 {strides = array<i32>} : memref<128x128xf32, #tpu.memory_space<vmem>>, vector<128x128xf32>,
    } else {
    }
    return
  }
  func.func @transform_0(%arg0: i32, %arg1: i32, %arg2: i32, %arg3: i32) -> (i32, i32, i32) {
    %c0_i32 = arith.constant 0 : i32
    return %arg2, %arg3, %arg1 : i32, i32, i32
  }
  func.func @transform_1(%arg0: i32, %arg1: i32, %arg2: i32, %arg3: i32) -> (i32, i32, i32) {
    %c0_i32 = arith.constant 0 : i32
    return %arg2, %arg3, %arg0 : i32, i32, i32
  }
  func.func @transform_2(%arg0: i32, %arg1: i32, %arg2: i32, %arg3: i32) -> (i32, i32) {
    %c2_i32 = arith.constant 2 : i32
    %0 = arith.muli %arg2, %c2_i32 : i32
    %1 = arith.addi %0, %arg1 : i32
    %c0_i32 = arith.constant 0 : i32
    return %arg0, %1 : i32, i32
  }
}

</mosaic_0001>

<llo_original>
// kernel: model_forward.1
$region0: #{model_forward.1}
  #allocation0 [shape = 'u32[]', space=smem, size = 0x4, offset = 0x4, fixed_abs, tag = 'smem constant byte address 0x4 - core index']
  #allocation1 [shape = 'u32[144,128]{1,0:T(1,128)}', space=vmem, size = 0x12000, scoped, tag = 'internal scratch']
  #allocation2 [shape = 'f32[128,128]{1,0:T(8,128)}', space=vmem, size = 0x10000, scoped, tag = 'scratch operand']
  %s0 = inlined_call_operand.vmem [shape: f32[2,256,256], index: 0, kind: input, shape index: {}]
  %s1 = inlined_call_operand.vmem [shape: f32[2,256,256], index: 1, kind: input, shape index: {}]
  %s2 = inlined_call_operand.vmem [shape: f32[256,512], index: 2, kind: output, shape index: {}]
  %s3 = sld [smem:[#allocation0]]
  $region159: #{model_forward.1} parent=0
    _
  %s5 = ssub.s32 1, %s3
  %s6 = scalar_select 0, %s5, %s3
  $region1: #{model_forward.1} parent=0
    #allocation3 [shape = 'u8[131072]{0}', space=vmem, size = 0x20000, scoped, tag = 'input window, operand 0']
    #allocation4 [shape = 'u8[131072]{0}', space=vmem, size = 0x20000, scoped, tag = 'input window, operand 1']
    #allocation5 [shape = 'u8[131072]{0}', space=vmem, size = 0x20000, scoped, tag = 'output window, operand 0']
    loop: start=0, step=1, limit=18
    $region2: #{model_forward.1} parent=1 // loop_pre_header
      _
    $region3: #{model_forward.1} parent=1 // loop_header
      %s8 = sphi 0, %s12
      %p9 = scmp.ge.s32.totalorder %s8, 18
      %s15 = sphi 0, %s41
      %s16 = sphi 0, %s37
      %s17 = sphi 0, %s33
      %s18 = sphi 0, %s29
      %s19 = sphi 0, %s15
      %s20 = sphi 0, %s16
      %s21 = sphi 0, %s17
      %s22 = sphi 0, %s18
      %s23 = sphi 0, %s19
      %s24 = sphi 0, %s20
      %s25 = sphi 0, %s21
      %s26 = sphi 0, %s22
      %s48 = sphi 0, %s50
      %s51 = sphi 0, %s48
      %s52 = sphi 0, %s51
      %s68 = sphi 0, %s52
      %s78 = sphi 0, %s80
      %s81 = sphi 0, %s78
      %s82 = sphi 0, %s81
      %s98 = sphi 0, %s82
      %s110 = sphi 0, %s112
      %s113 = sphi 0, %s110
      %s114 = sphi 0, %s113
      %s130 = sphi 0, %s114
    $region4: #{model_forward.1} parent=1 // loop_header_branch
      %11 = sbr.rel (%p9) target = $region8
    $region5: #{model_forward.1} parent=1 // loop_body
      %s13 = ssub.s32 %s8, 1
      %s14 = ssub.s32 %s8, 2
      %s27 = sadd.s32 1, %s18
      %p28 = scmp.ge.s32.totalorder %s27, 2
      %s29 = scalar_select %p28, 0, %s27
      %s30 = sadd.s32 1, %s17
      %s31 = scalar_select %p28, %s30, %s17
      %p32 = scmp.ge.s32.totalorder %s31, 2
      %s33 = scalar_select %p32, 0, %s31
      %s34 = sadd.s32 1, %s16
      %s35 = scalar_select %p32, %s34, %s16
      %p36 = scmp.ge.s32.totalorder %s35, 2
      %s37 = scalar_select %p36, 0, %s35
      %s38 = sadd.s32 1, %s15
      %s39 = scalar_select %p36, %s38, %s15
      %p40 = scmp.ge.s32.totalorder %s39, 2
      %s41 = scalar_select %p40, 0, %s39
      %s42 = ssub.s32 %s17, %s33
      %s43 = ssub.s32 %s18, %s29
      %s44 = sor.u32 %s42, %s43
      %s45 = ssub.s32 %s16, %s37
      %s46 = sor.u32 %s44, %s45
      %p47 = scmp.eq.s32.totalorder %s46, 0
      %s49 = sadd.s32 %s48, 1
      %s50 = scalar_select %p47, %s48, %s49
      %p53 = pneg %p47
      %p54 = scmp.eq.s32.totalorder %s8, 15
      %p55 = por %p53, %p54
      %p56 = scmp.ne.s32.totalorder %s48, %s51
      %p57 = scmp.eq.s32.totalorder %s8, 0
      %p58 = por %p56, %p57
      %p59 = scmp.ne.s32.totalorder %s48, %s51
      %p60 = scmp.eq.s32.totalorder %s13, 15
      %p61 = por %p59, %p60
      %p62 = scmp.ne.s32.totalorder %s51, %s52
      %p63 = scmp.eq.s32.totalorder %s13, 0
      %p64 = por %p62, %p63
      %p65 = scmp.ne.s32.totalorder %s51, %s52
      %p66 = scmp.eq.s32.totalorder %s14, 15
      %p67 = por %p65, %p66
      %p69 = scmp.ne.s32.totalorder %s52, %s68
      %p70 = scmp.eq.s32.totalorder %s14, 0
      %p71 = por %p69, %p70
      %s72 = ssub.s32 %s17, %s33
      %s73 = ssub.s32 %s18, %s29
      %s74 = sor.u32 %s72, %s73
      %s75 = ssub.s32 %s15, %s41
      %s76 = sor.u32 %s74, %s75
      %p77 = scmp.eq.s32.totalorder %s76, 0
      %s79 = sadd.s32 %s78, 1
      %s80 = scalar_select %p77, %s78, %s79
      %p83 = pneg %p77
      %p84 = scmp.eq.s32.totalorder %s8, 15
      %p85 = por %p83, %p84
      %p86 = scmp.ne.s32.totalorder %s78, %s81
      %p87 = scmp.eq.s32.totalorder %s8, 0
      %p88 = por %p86, %p87
      %p89 = scmp.ne.s32.totalorder %s78, %s81
      %p90 = scmp.eq.s32.totalorder %s13, 15
      %p91 = por %p89, %p90
      %p92 = scmp.ne.s32.totalorder %s81, %s82
      %p93 = scmp.eq.s32.totalorder %s13, 0
      %p94 = por %p92, %p93
      %p95 = scmp.ne.s32.totalorder %s81, %s82
      %p96 = scmp.eq.s32.totalorder %s14, 15
      %p97 = por %p95, %p96
      %p99 = scmp.ne.s32.totalorder %s82, %s98
      %p100 = scmp.eq.s32.totalorder %s14, 0
      %p101 = por %p99, %p100
      %s102 = smul.u32 %s17, 2
      %s103 = sadd.s32 %s102, %s16
      %s104 = smul.u32 %s33, 2
      %s105 = sadd.s32 %s104, %s37
      %s106 = ssub.s32 %s15, %s41
      %s107 = ssub.s32 %s103, %s105
      %s108 = sor.u32 %s106, %s107
      %p109 = scmp.eq.s32.totalorder %s108, 0
      %s111 = sadd.s32 %s110, 1
      %s112 = scalar_select %p109, %s110, %s111
      %p115 = pneg %p109
      %p116 = scmp.eq.s32.totalorder %s8, 15
      %p117 = por %p115, %p116
      %p118 = scmp.ne.s32.totalorder %s110, %s113
      %p119 = scmp.eq.s32.totalorder %s8, 0
      %p120 = por %p118, %p119
      %p121 = scmp.ne.s32.totalorder %s110, %s113
      %p122 = scmp.eq.s32.totalorder %s13, 15
      %p123 = por %p121, %p122
      %p124 = scmp.ne.s32.totalorder %s113, %s114
      %p125 = scmp.eq.s32.totalorder %s13, 0
      %p126 = por %p124, %p125
      %p127 = scmp.ne.s32.totalorder %s113, %s114
      %p128 = scmp.eq.s32.totalorder %s14, 15
      %p129 = por %p127, %p128
      %p131 = scmp.ne.s32.totalorder %s114, %s130
      %p132 = scmp.eq.s32.totalorder %s14, 0
      %p133 = por %p131, %p132
      %p134 = scmp.le.s32.totalorder 1, %s8
      %p135 = scmp.lt.s32.totalorder %s8, 17
      %p136 = pnand %p134, %p135
      %p137 = pneg %p136
      // Predicated region
      $region9: #{model_forward.1} parent=5 // pred_check
        _
      $region10: #{model_forward.1} parent=5 // pred_check_branch
        %139 = sbr.rel (%p136) target = $region12
      $region11: #{model_forward.1} parent=5 // pred_region
        %s140 = ssub.s32 %s8, 1
      $region12: #{model_forward.1} parent=5 // pred_fallthru
        _
      %p141 = scmp.lt.s32.totalorder %s8, 16
      // Predicated region
      $region13: #{model_forward.1} parent=5 // pred_check
        %p142 = pneg %p141
      $region14: #{model_forward.1} parent=5 // pred_check_branch
        %144 = sbr.rel (%p142) target = $region16
      $region15: #{model_forward.1} parent=5 // pred_region
        // Predicated region
        $region17: #{model_forward.1} parent=15 // pred_check
          %p145 = pneg %p58
        $region18: #{model_forward.1} parent=15 // pred_check_branch
          %147 = sbr.rel (%p145) target = $region20
        $region19: #{model_forward.1} parent=15 // pred_region
          %s148 = sand.u32 %s48, 1
          %s149 = sand.u32 %s48, 1
          %s150 = smul.addr %s149, 128
          %s151 = scalar_lea.vmem [#allocation3], %s150
          %s152 = smul.u32 16, %s18
          %s153 = smul.addr %s152, 2
          %s154 = sadd.s32 %s16, %s153
          %s155 = smul.addr %s17, 64
          %s156 = sadd.s32 %s154, %s155
          %s157 = smul.addr %s156, 8
          %s158 = scalar_lea.vmem %s0, %s157
          // Predicated region
          $region21: #{model_forward.1} parent=19 // pred_check
            _
          $region22: #{model_forward.1} parent=19 // pred_check_branch
            %160 = sbr.rel (0) target = $region24
          $region23: #{model_forward.1} parent=19 // pred_region
            // Predicated region
            $region25: #{model_forward.1} parent=23 // pred_check
              _
            $region26: #{model_forward.1} parent=23 // pred_check_branch
              %162 = sbr.rel (0) target = $region28
            $region27: #{model_forward.1} parent=23 // pred_region
              // Predicated region
              $region40: #{model_forward.1} parent=27 // pred_check
                _
              $region41: #{model_forward.1} parent=27 // pred_check_branch
                %207 = sbr.rel (0) target = $region43
              $region42: #{model_forward.1} parent=27 // pred_region
                loop: start=0, step=1, limit=1
                $region44: #{model_forward.1} parent=42 // loop_pre_header
                  _
                $region45: #{model_forward.1} parent=42 // loop_header
                  %s209 = sphi 0, %s213
                  %p210 = scmp.ge.s32.totalorder %s209, 1
                  %s214 = sphi %s158, %s158
                  %s215 = sphi %s151, %s151
                $region46: #{model_forward.1} parent=42 // loop_header_branch
                  %212 = sbr.rel (%p210) target = $region50
                $region47: #{model_forward.1} parent=42 // loop_body
                  %v216 = vld [vmem:[%s214] sm:$0xff]
                  %217 = vst [vmem:[%s215] sm:$0xff] %v216
                  %v218 = vld [vmem:[%s214 + $0x10] sm:$0xff]
                  %219 = vst [vmem:[%s215 + $0x8] sm:$0xff] %v218
                  %v220 = vld [vmem:[%s214 + $0x20] sm:$0xff]
                  %221 = vst [vmem:[%s215 + $0x10] sm:$0xff] %v220
                  %v222 = vld [vmem:[%s214 + $0x30] sm:$0xff]
                  %223 = vst [vmem:[%s215 + $0x18] sm:$0xff] %v222
                  %v224 = vld [vmem:[%s214 + $0x40] sm:$0xff]
                  %225 = vst [vmem:[%s215 + $0x20] sm:$0xff] %v224
                  %v226 = vld [vmem:[%s214 + $0x50] sm:$0xff]
                  %227 = vst [vmem:[%s215 + $0x28] sm:$0xff] %v226
                  %v228 = vld [vmem:[%s214 + $0x60] sm:$0xff]
                  %229 = vst [vmem:[%s215 + $0x30] sm:$0xff] %v228
                  %v230 = vld [vmem:[%s214 + $0x70] sm:$0xff]
                  %231 = vst [vmem:[%s215 + $0x38] sm:$0xff] %v230
                  %v232 = vld [vmem:[%s214 + $0x80] sm:$0xff]
                  %233 = vst [vmem:[%s215 + $0x40] sm:$0xff] %v232
                  %v234 = vld [vmem:[%s214 + $0x90] sm:$0xff]
                  %235 = vst [vmem:[%s215 + $0x48] sm:$0xff] %v234
                  %v236 = vld [vmem:[%s214 + $0xa0] sm:$0xff]
                  %237 = vst [vmem:[%s215 + $0x50] sm:$0xff] %v236
                  %v238 = vld [vmem:[%s214 + $0xb0] sm:$0xff]
                  %239 = vst [vmem:[%s215 + $0x58] sm:$0xff] %v238
                  %v240 = vld [vmem:[%s214 + $0xc0] sm:$0xff]
                  %241 = vst [vmem:[%s215 + $0x60] sm:$0xff] %v240
                  %v242 = vld [vmem:[%s214 + $0xd0] sm:$0xff]
                  %243 = vst [vmem:[%s215 + $0x68] sm:$0xff] %v242
                  %v244 = vld [vmem:[%s214 + $0xe0] sm:$0xff]
                  %245 = vst [vmem:[%s215 + $0x70] sm:$0xff] %v244
                  %v246 = vld [vmem:[%s214 + $0xf0] sm:$0xff]
                  %247 = vst [vmem:[%s215 + $0x78] sm:$0xff] %v246
                $region48: #{model_forward.1} parent=42 // loop_footer
                  %s213 = sadd.s32 1, %s209
                $region49: #{model_forward.1} parent=42 // loop_footer_branch
                  %208 = sbr.rel target = $region45
                $region50: #{model_forward.1} parent=42 // loop_exit
                  _
              $region43: #{model_forward.1} parent=27 // pred_fallthru
                _
              // Predicated region
              $region51: #{model_forward.1} parent=27 // pred_check
                _
              $region52: #{model_forward.1} parent=27 // pred_check_branch
                %249 = sbr.rel target = $region54
              $region53: #{model_forward.1} parent=27 // pred_region
                _
              $region54: #{model_forward.1} parent=27 // pred_fallthru
                _
            $region28: #{model_forward.1} parent=23 // pred_fallthru
              _
            // Predicated region
            $region29: #{model_forward.1} parent=23 // pred_check
              _
            $region30: #{model_forward.1} parent=23 // pred_check_branch
              %164 = sbr.rel target = $region32
            $region31: #{model_forward.1} parent=23 // pred_region
              loop: start=0, step=1, limit=1
              $region33: #{model_forward.1} parent=31 // loop_pre_header
                _
              $region34: #{model_forward.1} parent=31 // loop_header
                %s167 = sphi 0, %s171
                %p168 = scmp.ge.s32.totalorder %s167, 1
                %s172 = sphi %s158, %s158
                %s173 = sphi %s151, %s151
              $region35: #{model_forward.1} parent=31 // loop_header_branch
                %170 = sbr.rel (%p168) target = $region39
              $region36: #{model_forward.1} parent=31 // loop_body
                %v174 = vld [vmem:[%s172] sm:$0xff]
                %175 = vst [vmem:[%s173] sm:$0xff] %v174
                %v176 = vld [vmem:[%s172 + $0x10] sm:$0xff]
                %177 = vst [vmem:[%s173 + $0x8] sm:$0xff] %v176
                %v178 = vld [vmem:[%s172 + $0x20] sm:$0xff]
                %179 = vst [vmem:[%s173 + $0x10] sm:$0xff] %v178
                %v180 = vld [vmem:[%s172 + $0x30] sm:$0xff]
                %181 = vst [vmem:[%s173 + $0x18] sm:$0xff] %v180
                %v182 = vld [vmem:[%s172 + $0x40] sm:$0xff]
                %183 = vst [vmem:[%s173 + $0x20] sm:$0xff] %v182
                %v184 = vld [vmem:[%s172 + $0x50] sm:$0xff]
                %185 = vst [vmem:[%s173 + $0x28] sm:$0xff] %v184
                %v186 = vld [vmem:[%s172 + $0x60] sm:$0xff]
                %187 = vst [vmem:[%s173 + $0x30] sm:$0xff] %v186
                %v188 = vld [vmem:[%s172 + $0x70] sm:$0xff]
                %189 = vst [vmem:[%s173 + $0x38] sm:$0xff] %v188
                %v190 = vld [vmem:[%s172 + $0x80] sm:$0xff]
                %191 = vst [vmem:[%s173 + $0x40] sm:$0xff] %v190
                %v192 = vld [vmem:[%s172 + $0x90] sm:$0xff]
                %193 = vst [vmem:[%s173 + $0x48] sm:$0xff] %v192
                %v194 = vld [vmem:[%s172 + $0xa0] sm:$0xff]
                %195 = vst [vmem:[%s173 + $0x50] sm:$0xff] %v194
                %v196 = vld [vmem:[%s172 + $0xb0] sm:$0xff]
                %197 = vst [vmem:[%s173 + $0x58] sm:$0xff] %v196
                %v198 = vld [vmem:[%s172 + $0xc0] sm:$0xff]
                %199 = vst [vmem:[%s173 + $0x60] sm:$0xff] %v198
                %v200 = vld [vmem:[%s172 + $0xd0] sm:$0xff]
                %201 = vst [vmem:[%s173 + $0x68] sm:$0xff] %v200
                %v202 = vld [vmem:[%s172 + $0xe0] sm:$0xff]
                %203 = vst [vmem:[%s173 + $0x70] sm:$0xff] %v202
                %v204 = vld [vmem:[%s172 + $0xf0] sm:$0xff]
                %205 = vst [vmem:[%s173 + $0x78] sm:$0xff] %v204
              $region37: #{model_forward.1} parent=31 // loop_footer
                %s171 = sadd.s32 1, %s167
              $region38: #{model_forward.1} parent=31 // loop_footer_branch
                %166 = sbr.rel target = $region34
              $region39: #{model_forward.1} parent=31 // loop_exit
                _
            $region32: #{model_forward.1} parent=23 // pred_fallthru
              _
          $region24: #{model_forward.1} parent=19 // pred_fallthru
            _
          %250 = vnop
        $region20: #{model_forward.1} parent=15 // pred_fallthru
          _
        // Predicated region
        $region55: #{model_forward.1} parent=15 // pred_check
          %p251 = pneg %p88
        $region56: #{model_forward.1} parent=15 // pred_check_branch
          %253 = sbr.rel (%p251) target = $region58
        $region57: #{model_forward.1} parent=15 // pred_region
          %s254 = sand.u32 %s78, 1
          %s255 = sand.u32 %s78, 1
          %s256 = smul.addr %s255, 128
          %s257 = scalar_lea.vmem [#allocation4], %s256
          %s258 = smul.u32 16, %s18
          %s259 = smul.addr %s258, 2
          %s260 = sadd.s32 %s15, %s259
          %s261 = smul.addr %s17, 64
          %s262 = sadd.s32 %s260, %s261
          %s263 = smul.addr %s262, 8
          %s264 = scalar_lea.vmem %s1, %s263
          // Predicated region
          $region59: #{model_forward.1} parent=57 // pred_check
            _
          $region60: #{model_forward.1} parent=57 // pred_check_branch
            %266 = sbr.rel (0) target = $region62
          $region61: #{model_forward.1} parent=57 // pred_region
            // Predicated region
            $region63: #{model_forward.1} parent=61 // pred_check
              _
            $region64: #{model_forward.1} parent=61 // pred_check_branch
              %268 = sbr.rel (0) target = $region66
            $region65: #{model_forward.1} parent=61 // pred_region
              // Predicated region
              $region78: #{model_forward.1} parent=65 // pred_check
                _
              $region79: #{model_forward.1} parent=65 // pred_check_branch
                %313 = sbr.rel (0) target = $region81
              $region80: #{model_forward.1} parent=65 // pred_region
                loop: start=0, step=1, limit=1
                $region82: #{model_forward.1} parent=80 // loop_pre_header
                  _
                $region83: #{model_forward.1} parent=80 // loop_header
                  %s315 = sphi 0, %s319
                  %p316 = scmp.ge.s32.totalorder %s315, 1
                  %s320 = sphi %s264, %s264
                  %s321 = sphi %s257, %s257
                $region84: #{model_forward.1} parent=80 // loop_header_branch
                  %318 = sbr.rel (%p316) target = $region88
                $region85: #{model_forward.1} parent=80 // loop_body
                  %v322 = vld [vmem:[%s320] sm:$0xff]
                  %323 = vst [vmem:[%s321] sm:$0xff] %v322
                  %v324 = vld [vmem:[%s320 + $0x10] sm:$0xff]
                  %325 = vst [vmem:[%s321 + $0x8] sm:$0xff] %v324
                  %v326 = vld [vmem:[%s320 + $0x20] sm:$0xff]
                  %327 = vst [vmem:[%s321 + $0x10] sm:$0xff] %v326
                  %v328 = vld [vmem:[%s320 + $0x30] sm:$0xff]
                  %329 = vst [vmem:[%s321 + $0x18] sm:$0xff] %v328
                  %v330 = vld [vmem:[%s320 + $0x40] sm:$0xff]
                  %331 = vst [vmem:[%s321 + $0x20] sm:$0xff] %v330
                  %v332 = vld [vmem:[%s320 + $0x50] sm:$0xff]
                  %333 = vst [vmem:[%s321 + $0x28] sm:$0xff] %v332
                  %v334 = vld [vmem:[%s320 + $0x60] sm:$0xff]
                  %335 = vst [vmem:[%s321 + $0x30] sm:$0xff] %v334
                  %v336 = vld [vmem:[%s320 + $0x70] sm:$0xff]
                  %337 = vst [vmem:[%s321 + $0x38] sm:$0xff] %v336
                  %v338 = vld [vmem:[%s320 + $0x80] sm:$0xff]
                  %339 = vst [vmem:[%s321 + $0x40] sm:$0xff] %v338
                  %v340 = vld [vmem:[%s320 + $0x90] sm:$0xff]
                  %341 = vst [vmem:[%s321 + $0x48] sm:$0xff] %v340
                  %v342 = vld [vmem:[%s320 + $0xa0] sm:$0xff]
                  %343 = vst [vmem:[%s321 + $0x50] sm:$0xff] %v342
                  %v344 = vld [vmem:[%s320 + $0xb0] sm:$0xff]
                  %345 = vst [vmem:[%s321 + $0x58] sm:$0xff] %v344
                  %v346 = vld [vmem:[%s320 + $0xc0] sm:$0xff]
                  %347 = vst [vmem:[%s321 + $0x60] sm:$0xff] %v346
                  %v348 = vld [vmem:[%s320 + $0xd0] sm:$0xff]
                  %349 = vst [vmem:[%s321 + $0x68] sm:$0xff] %v348
                  %v350 = vld [vmem:[%s320 + $0xe0] sm:$0xff]
                  %351 = vst [vmem:[%s321 + $0x70] sm:$0xff] %v350
                  %v352 = vld [vmem:[%s320 + $0xf0] sm:$0xff]
                  %353 = vst [vmem:[%s321 + $0x78] sm:$0xff] %v352
                $region86: #{model_forward.1} parent=80 // loop_footer
                  %s319 = sadd.s32 1, %s315
                $region87: #{model_forward.1} parent=80 // loop_footer_branch
                  %314 = sbr.rel target = $region83
                $region88: #{model_forward.1} parent=80 // loop_exit
                  _
              $region81: #{model_forward.1} parent=65 // pred_fallthru
                _
              // Predicated region
              $region89: #{model_forward.1} parent=65 // pred_check
                _
              $region90: #{model_forward.1} parent=65 // pred_check_branch
                %355 = sbr.rel target = $region92
              $region91: #{model_forward.1} parent=65 // pred_region
                _
              $region92: #{model_forward.1} parent=65 // pred_fallthru
                _
            $region66: #{model_forward.1} parent=61 // pred_fallthru
              _
            // Predicated region
            $region67: #{model_forward.1} parent=61 // pred_check
              _
            $region68: #{model_forward.1} parent=61 // pred_check_branch
              %270 = sbr.rel target = $region70
            $region69: #{model_forward.1} parent=61 // pred_region
              loop: start=0, step=1, limit=1
              $region71: #{model_forward.1} parent=69 // loop_pre_header
                _
              $region72: #{model_forward.1} parent=69 // loop_header
                %s273 = sphi 0, %s277
                %p274 = scmp.ge.s32.totalorder %s273, 1
                %s278 = sphi %s264, %s264
                %s279 = sphi %s257, %s257
              $region73: #{model_forward.1} parent=69 // loop_header_branch
                %276 = sbr.rel (%p274) target = $region77
              $region74: #{model_forward.1} parent=69 // loop_body
                %v280 = vld [vmem:[%s278] sm:$0xff]
                %281 = vst [vmem:[%s279] sm:$0xff] %v280
                %v282 = vld [vmem:[%s278 + $0x10] sm:$0xff]
                %283 = vst [vmem:[%s279 + $0x8] sm:$0xff] %v282
                %v284 = vld [vmem:[%s278 + $0x20] sm:$0xff]
                %285 = vst [vmem:[%s279 + $0x10] sm:$0xff] %v284
                %v286 = vld [vmem:[%s278 + $0x30] sm:$0xff]
                %287 = vst [vmem:[%s279 + $0x18] sm:$0xff] %v286
                %v288 = vld [vmem:[%s278 + $0x40] sm:$0xff]
                %289 = vst [vmem:[%s279 + $0x20] sm:$0xff] %v288
                %v290 = vld [vmem:[%s278 + $0x50] sm:$0xff]
                %291 = vst [vmem:[%s279 + $0x28] sm:$0xff] %v290
                %v292 = vld [vmem:[%s278 + $0x60] sm:$0xff]
                %293 = vst [vmem:[%s279 + $0x30] sm:$0xff] %v292
                %v294 = vld [vmem:[%s278 + $0x70] sm:$0xff]
                %295 = vst [vmem:[%s279 + $0x38] sm:$0xff] %v294
                %v296 = vld [vmem:[%s278 + $0x80] sm:$0xff]
                %297 = vst [vmem:[%s279 + $0x40] sm:$0xff] %v296
                %v298 = vld [vmem:[%s278 + $0x90] sm:$0xff]
                %299 = vst [vmem:[%s279 + $0x48] sm:$0xff] %v298
                %v300 = vld [vmem:[%s278 + $0xa0] sm:$0xff]
                %301 = vst [vmem:[%s279 + $0x50] sm:$0xff] %v300
                %v302 = vld [vmem:[%s278 + $0xb0] sm:$0xff]
                %303 = vst [vmem:[%s279 + $0x58] sm:$0xff] %v302
                %v304 = vld [vmem:[%s278 + $0xc0] sm:$0xff]
                %305 = vst [vmem:[%s279 + $0x60] sm:$0xff] %v304
                %v306 = vld [vmem:[%s278 + $0xd0] sm:$0xff]
                %307 = vst [vmem:[%s279 + $0x68] sm:$0xff] %v306
                %v308 = vld [vmem:[%s278 + $0xe0] sm:$0xff]
                %309 = vst [vmem:[%s279 + $0x70] sm:$0xff] %v308
                %v310 = vld [vmem:[%s278 + $0xf0] sm:$0xff]
                %311 = vst [vmem:[%s279 + $0x78] sm:$0xff] %v310
              $region75: #{model_forward.1} parent=69 // loop_footer
                %s277 = sadd.s32 1, %s273
              $region76: #{model_forward.1} parent=69 // loop_footer_branch
                %272 = sbr.rel target = $region72
              $region77: #{model_forward.1} parent=69 // loop_exit
                _
            $region70: #{model_forward.1} parent=61 // pred_fallthru
              _
          $region62: #{model_forward.1} parent=57 // pred_fallthru
            _
          %356 = vnop
        $region58: #{model_forward.1} parent=15 // pred_fallthru
          _
      $region16: #{model_forward.1} parent=5 // pred_fallthru
        _
      %p357 = scmp.le.s32.totalorder 1, %s8
      %p358 = scmp.lt.s32.totalorder %s8, 17
      %p359 = pnand %p357, %p358
      %p360 = pneg %p359
      // Predicated region
      $region93: #{model_forward.1} parent=5 // pred_check
        _
      $region94: #{model_forward.1} parent=5 // pred_check_branch
        %362 = sbr.rel (%p359) target = $region96
      $region95: #{model_forward.1} parent=5 // pred_region
        %s363 = ssub.s32 %s8, 1
        %s364 = sand.u32 %s51, 1
        %s365 = sand.u32 %s51, 1
        %s366 = smul.addr %s365, 128
        %s367 = scalar_lea.vmem [#allocation3], %s366
        // Predicated region
        $region97: #{model_forward.1} parent=95 // pred_check
          %p368 = pneg %p64
        $region98: #{model_forward.1} parent=95 // pred_check_branch
          %370 = sbr.rel (%p368) target = $region100
        $region99: #{model_forward.1} parent=95 // pred_region
          _
        $region100: #{model_forward.1} parent=95 // pred_fallthru
          _
        %s371 = sand.u32 %s81, 1
        %s372 = sand.u32 %s81, 1
        %s373 = smul.addr %s372, 128
        %s374 = scalar_lea.vmem [#allocation4], %s373
        // Predicated region
        $region101: #{model_forward.1} parent=95 // pred_check
          %p375 = pneg %p94
        $region102: #{model_forward.1} parent=95 // pred_check_branch
          %377 = sbr.rel (%p375) target = $region104
        $region103: #{model_forward.1} parent=95 // pred_region
          _
        $region104: #{model_forward.1} parent=95 // pred_fallthru
          _
        %s378 = sand.u32 %s51, 1
        %s379 = sand.u32 %s51, 1
        %s380 = smul.addr %s379, 128
        %s381 = scalar_lea.vmem [#allocation3], %s380
        %p382 = pneg %p64
        %p383 = pneg %p61
        %s384 = sand.u32 %s81, 1
        %s385 = sand.u32 %s81, 1
        %s386 = smul.addr %s385, 128
        %s387 = scalar_lea.vmem [#allocation4], %s386
        %p388 = pneg %p94
        %p389 = pneg %p91
        %p390 = pneg %p126
        %p391 = pneg %p123
        %s392 = sand.u32 %s113, 1
        %s393 = sand.u32 %s113, 1
        %s394 = smul.addr %s393, 128
        %s395 = scalar_lea.vmem [#allocation5], %s394
        %s396 = smul.u32 16, %s22
        %s397 = smul.u32 16, %s22
        %s398 = smul.u32 %s21, 2
        %s399 = sadd.s32 %s398, %s20
        %s400 = smul.u32 16, %s19
        %p401 = scmp.eq.s32.totalorder %s22, 0
        // Predicated region
        $region105: #{model_forward.1} parent=95 // pred_check
          %p402 = pneg %p401
        $region106: #{model_forward.1} parent=95 // pred_check_branch
          %404 = sbr.rel (%p402) target = $region108
        $region107: #{model_forward.1} parent=95 // pred_region
          %405 = vst [vmem:[#allocation2] sm:$0xff] 0.0
          %406 = vst [vmem:[#allocation2 + $0x8] sm:$0xff] 0.0
          %407 = vst [vmem:[#allocation2 + $0x10] sm:$0xff] 0.0
          %408 = vst [vmem:[#allocation2 + $0x18] sm:$0xff] 0.0
          %409 = vst [vmem:[#allocation2 + $0x20] sm:$0xff] 0.0
          %410 = vst [vmem:[#allocation2 + $0x28] sm:$0xff] 0.0
          %411 = vst [vmem:[#allocation2 + $0x30] sm:$0xff] 0.0
          %412 = vst [vmem:[#allocation2 + $0x38] sm:$0xff] 0.0
          %413 = vst [vmem:[#allocation2 + $0x40] sm:$0xff] 0.0
          %414 = vst [vmem:[#allocation2 + $0x48] sm:$0xff] 0.0
          %415 = vst [vmem:[#allocation2 + $0x50] sm:$0xff] 0.0
          %416 = vst [vmem:[#allocation2 + $0x58] sm:$0xff] 0.0
          %417 = vst [vmem:[#allocation2 + $0x60] sm:$0xff] 0.0
          %418 = vst [vmem:[#allocation2 + $0x68] sm:$0xff] 0.0
          %419 = vst [vmem:[#allocation2 + $0x70] sm:$0xff] 0.0
          %420 = vst [vmem:[#allocation2 + $0x78] sm:$0xff] 0.0
        $region108: #{model_forward.1} parent=95 // pred_fallthru
          _
        %v421 = vld [vmem:[#allocation2] sm:$0xff]
        %v422 = vld [vmem:[#allocation2 + $0x8] sm:$0xff]
        %v423 = vld [vmem:[#allocation2 + $0x10] sm:$0xff]
        %v424 = vld [vmem:[#allocation2 + $0x18] sm:$0xff]
        %v425 = vld [vmem:[#allocation2 + $0x20] sm:$0xff]
        %v426 = vld [vmem:[#allocation2 + $0x28] sm:$0xff]
        %v427 = vld [vmem:[#allocation2 + $0x30] sm:$0xff]
        %v428 = vld [vmem:[#allocation2 + $0x38] sm:$0xff]
        %v429 = vld [vmem:[#allocation2 + $0x40] sm:$0xff]
        %v430 = vld [vmem:[#allocation2 + $0x48] sm:$0xff]
        %v431 = vld [vmem:[#allocation2 + $0x50] sm:$0xff]
        %v432 = vld [vmem:[#allocation2 + $0x58] sm:$0xff]
        %v433 = vld [vmem:[#allocation2 + $0x60] sm:$0xff]
        %v434 = vld [vmem:[#allocation2 + $0x68] sm:$0xff]
        %v435 = vld [vmem:[#allocation2 + $0x70] sm:$0xff]
        %v436 = vld [vmem:[#allocation2 + $0x78] sm:$0xff]
        %v437 = vld [vmem:[%s374] sm:$0xff]
        %v438 = vld [vmem:[%s374 + $0x8] sm:$0xff]
        %v439 = vld [vmem:[%s374 + $0x10] sm:$0xff]
        %v440 = vld [vmem:[%s374 + $0x18] sm:$0xff]
        %v441 = vld [vmem:[%s374 + $0x20] sm:$0xff]
        %v442 = vld [vmem:[%s374 + $0x28] sm:$0xff]
        %v443 = vld [vmem:[%s374 + $0x30] sm:$0xff]
        %v444 = vld [vmem:[%s374 + $0x38] sm:$0xff]
        %v445 = vld [vmem:[%s374 + $0x40] sm:$0xff]
        %v446 = vld [vmem:[%s374 + $0x48] sm:$0xff]
        %v447 = vld [vmem:[%s374 + $0x50] sm:$0xff]
        %v448 = vld [vmem:[%s374 + $0x58] sm:$0xff]
        %v449 = vld [vmem:[%s374 + $0x60] sm:$0xff]
        %v450 = vld [vmem:[%s374 + $0x68] sm:$0xff]
        %v451 = vld [vmem:[%s374 + $0x70] sm:$0xff]
        %v452 = vld [vmem:[%s374 + $0x78] sm:$0xff]
        %v453 = vld [vmem:[%s367] sm:$0xff]
        %v454 = vld [vmem:[%s367 + $0x8] sm:$0xff]
        %v455 = vld [vmem:[%s367 + $0x10] sm:$0xff]
        %v456 = vld [vmem:[%s367 + $0x18] sm:$0xff]
        %v457 = vld [vmem:[%s367 + $0x20] sm:$0xff]
        %v458 = vld [vmem:[%s367 + $0x28] sm:$0xff]
        %v459 = vld [vmem:[%s367 + $0x30] sm:$0xff]
        %v460 = vld [vmem:[%s367 + $0x38] sm:$0xff]
        %v461 = vld [vmem:[%s367 + $0x40] sm:$0xff]
        %v462 = vld [vmem:[%s367 + $0x48] sm:$0xff]
        %v463 = vld [vmem:[%s367 + $0x50] sm:$0xff]
        %v464 = vld [vmem:[%s367 + $0x58] sm:$0xff]
        %v465 = vld [vmem:[%s367 + $0x60] sm:$0xff]
        %v466 = vld [vmem:[%s367 + $0x68] sm:$0xff]
        %v467 = vld [vmem:[%s367 + $0x70] sm:$0xff]
        %v468 = vld [vmem:[%s367 + $0x78] sm:$0xff]
        %469 = vxpose.xlu0.b32.start [1/16] %v437, 128
        %470 = vxpose.xlu0.b32.cont [2/16] %v438, 128
        %471 = vxpose.xlu0.b32.cont [3/16] %v439, 128
        %472 = vxpose.xlu0.b32.cont [4/16] %v440, 128
        %473 = vxpose.xlu0.b32.cont [5/16] %v441, 128
        %474 = vxpose.xlu0.b32.cont [6/16] %v442, 128
        %475 = vxpose.xlu0.b32.cont [7/16] %v443, 128
        %476 = vxpose.xlu0.b32.cont [8/16] %v444, 128
        %477 = vxpose.xlu0.b32.cont [9/16] %v445, 128
        %478 = vxpose.xlu0.b32.cont [10/16] %v446, 128
        %479 = vxpose.xlu0.b32.cont [11/16] %v447, 128
        %480 = vxpose.xlu0.b32.cont [12/16] %v448, 128
        %481 = vxpose.xlu0.b32.cont [13/16] %v449, 128
        %482 = vxpose.xlu0.b32.cont [14/16] %v450, 128
        %483 = vxpose.xlu0.b32.cont [15/16] %v451, 128
        %484 = vxpose.xlu0.b32.end [16/16] %v452, 128
        %v485 = vpop.trf.xlu0
        %v486 = vpop.trf.xlu0
        %v487 = vpop.trf.xlu0
        %v488 = vpop.trf.xlu0
        %v489 = vpop.trf.xlu0
        %v490 = vpop.trf.xlu0
        %v491 = vpop.trf.xlu0
        %v492 = vpop.trf.xlu0
        %v493 = vpop.trf.xlu0
        %v494 = vpop.trf.xlu0
        %v495 = vpop.trf.xlu0
        %v496 = vpop.trf.xlu0
        %v497 = vpop.trf.xlu0
        %v498 = vpop.trf.xlu0
        %v499 = vpop.trf.xlu0
        %v500 = vpop.trf.xlu0
        %501 = vmatprep.subr.mxu0 0.0
        %502 = vmatpush1.msra.mxu0 %v453
        %503 = vmatprep.subr.mxu0 0.0
        %504 = vmatpush1.msra.mxu0 %v454
        %505 = vmatprep.subr.mxu0 0.0
        %506 = vmatpush1.msra.mxu0 %v455
        %507 = vmatprep.subr.mxu0 0.0
        %508 = vmatpush1.msra.mxu0 %v456
        %509 = vmatprep.subr.mxu0 0.0
        %510 = vmatpush1.msra.mxu0 %v457
        %511 = vmatprep.subr.mxu0 0.0
        %512 = vmatpush1.msra.mxu0 %v458
        %513 = vmatprep.subr.mxu0 0.0
        %514 = vmatpush1.msra.mxu0 %v459
        %515 = vmatprep.subr.mxu0 0.0
        %516 = vmatpush1.msra.mxu0 %v460
        %517 = vmatprep.subr.mxu0 0.0
        %518 = vmatpush1.msra.mxu0 %v461
        %519 = vmatprep.subr.mxu0 0.0
        %520 = vmatpush1.msra.mxu0 %v462
        %521 = vmatprep.subr.mxu0 0.0
        %522 = vmatpush1.msra.mxu0 %v463
        %523 = vmatprep.subr.mxu0 0.0
        %524 = vmatpush1.msra.mxu0 %v464
        %525 = vmatprep.subr.mxu0 0.0
        %526 = vmatpush1.msra.mxu0 %v465
        %527 = vmatprep.subr.mxu0 0.0
        %528 = vmatpush1.msra.mxu0 %v466
        %529 = vmatprep.subr.mxu0 0.0
        %530 = vmatpush1.msra.mxu0 %v467
        %531 = vmatprep.subr.mxu0 0.0
        %532 = vmatpush1.msra.mxu0 %v468
        %533 = vmatprep.subr.mxu0 0.0
        %534 = vmatpush1.msra.mxu0 0.0
        %535 = vmatprep.subr.mxu0 0.0
        %536 = vmatpush1.msra.mxu0 0.0
        %537 = vmatprep.subr.mxu0 0.0
        %538 = vmatpush1.msra.mxu0 0.0
        %539 = vmatprep.subr.mxu0 0.0
        %540 = vmatpush1.msra.mxu0 0.0
        %541 = vmatprep.subr.mxu0 0.0
        %542 = vmatpush1.msra.mxu0 0.0
        %543 = vmatprep.subr.mxu0 0.0
        %544 = vmatpush1.msra.mxu0 0.0
        %545 = vmatprep.subr.mxu0 0.0
        %546 = vmatpush1.msra.mxu0 0.0
        %547 = vmatprep.subr.mxu0 0.0
        %548 = vmatpush1.msra.mxu0 0.0
        %549 = vmatprep.subr.mxu0 0.0
        %550 = vmatpush1.msra.mxu0 0.0
        %551 = vmatprep.subr.mxu0 0.0
        %552 = vmatpush1.msra.mxu0 0.0
        %553 = vmatprep.subr.mxu0 0.0
        %554 = vmatpush1.msra.mxu0 0.0
        %555 = vmatprep.subr.mxu0 0.0
        %556 = vmatpush1.msra.mxu0 0.0
        %557 = vmatprep.subr.mxu0 0.0
        %558 = vmatpush1.msra.mxu0 0.0
        %559 = vmatprep.subr.mxu0 0.0
        %560 = vmatpush1.msra.mxu0 0.0
        %561 = vmatprep.subr.mxu0 0.0
        %562 = vmatpush1.msra.mxu0 0.0
        %563 = vmatprep.subr.mxu0 0.0
        %564 = vmatpush1.msra.mxu0 0.0
        %565 = vmatprep.mubr.f32.mxu0 0.0
        %566 = vmatmul.mubr.f32.gmra.mrb[0].mxu0 %v485
        %v567 = vpop.f32.mrb[0].mxu0
        %v568 = vadd.f32 0.0, %v567
        %v569 = vpop.f32.mrb[0].mxu0
        %570 = vmatprep.mubr.f32.mxu0 0.0
        %571 = vmatmul.mubr.f32.gmra.mrb[0].mxu0 %v486
        %v572 = vpop.f32.mrb[0].mxu0
        %v573 = vadd.f32 0.0, %v572
        %v574 = vpop.f32.mrb[0].mxu0
        %575 = vmatprep.mubr.f32.mxu0 0.0
        %576 = vmatmul.mubr.f32.gmra.mrb[0].mxu0 %v487
        %v577 = vpop.f32.mrb[0].mxu0
        %v578 = vadd.f32 0.0, %v577
        %v579 = vpop.f32.mrb[0].mxu0
        %580 = vmatprep.mubr.f32.mxu0 0.0
        %581 = vmatmul.mubr.f32.gmra.mrb[0].mxu0 %v488
        %v582 = vpop.f32.mrb[0].mxu0
        %v583 = vadd.f32 0.0, %v582
        %v584 = vpop.f32.mrb[0].mxu0
        %585 = vmatprep.mubr.f32.mxu0 0.0
        %586 = vmatmul.mubr.f32.gmra.mrb[0].mxu0 %v489
        %v587 = vpop.f32.mrb[0].mxu0
        %v588 = vadd.f32 0.0, %v587
        %v589 = vpop.f32.mrb[0].mxu0
        %590 = vmatprep.mubr.f32.mxu0 0.0
        %591 = vmatmul.mubr.f32.gmra.mrb[0].mxu0 %v490
        %v592 = vpop.f32.mrb[0].mxu0
        %v593 = vadd.f32 0.0, %v592
        %v594 = vpop.f32.mrb[0].mxu0
        %595 = vmatprep.mubr.f32.mxu0 0.0
        %596 = vmatmul.mubr.f32.gmra.mrb[0].mxu0 %v491
        %v597 = vpop.f32.mrb[0].mxu0
        %v598 = vadd.f32 0.0, %v597
        %v599 = vpop.f32.mrb[0].mxu0
        %600 = vmatprep.mubr.f32.mxu0 0.0
        %601 = vmatmul.mubr.f32.gmra.mrb[0].mxu0 %v492
        %v602 = vpop.f32.mrb[0].mxu0
        %v603 = vadd.f32 0.0, %v602
        %v604 = vpop.f32.mrb[0].mxu0
        %605 = vmatprep.mubr.f32.mxu0 0.0
        %606 = vmatmul.mubr.f32.gmra.mrb[0].mxu0 %v493
        %v607 = vpop.f32.mrb[0].mxu0
        %v608 = vadd.f32 0.0, %v607
        %v609 = vpop.f32.mrb[0].mxu0
        %610 = vmatprep.mubr.f32.mxu0 0.0
        %611 = vmatmul.mubr.f32.gmra.mrb[0].mxu0 %v494
        %v612 = vpop.f32.mrb[0].mxu0
        %v613 = vadd.f32 0.0, %v612
        %v614 = vpop.f32.mrb[0].mxu0
        %615 = vmatprep.mubr.f32.mxu0 0.0
        %616 = vmatmul.mubr.f32.gmra.mrb[0].mxu0 %v495
        %v617 = vpop.f32.mrb[0].mxu0
        %v618 = vadd.f32 0.0, %v617
        %v619 = vpop.f32.mrb[0].mxu0
        %620 = vmatprep.mubr.f32.mxu0 0.0
        %621 = vmatmul.mubr.f32.gmra.mrb[0].mxu0 %v496
        %v622 = vpop.f32.mrb[0].mxu0
        %v623 = vadd.f32 0.0, %v622
        %v624 = vpop.f32.mrb[0].mxu0
        %625 = vmatprep.mubr.f32.mxu0 0.0
        %626 = vmatmul.mubr.f32.gmra.mrb[0].mxu0 %v497
        %v627 = vpop.f32.mrb[0].mxu0
        %v628 = vadd.f32 0.0, %v627
        %v629 = vpop.f32.mrb[0].mxu0
        %630 = vmatprep.mubr.f32.mxu0 0.0
        %631 = vmatmul.mubr.f32.gmra.mrb[0].mxu0 %v498
        %v632 = vpop.f32.mrb[0].mxu0
        %v633 = vadd.f32 0.0, %v632
        %v634 = vpop.f32.mrb[0].mxu0
        %635 = vmatprep.mubr.f32.mxu0 0.0
        %636 = vmatmul.mubr.f32.gmra.mrb[0].mxu0 %v499
        %v637 = vpop.f32.mrb[0].mxu0
        %v638 = vadd.f32 0.0, %v637
        %v639 = vpop.f32.mrb[0].mxu0
        %640 = vmatprep.mubr.f32.mxu0 0.0
        %641 = vmatmul.mubr.f32.gmra.mrb[0].mxu0 %v500
        %v642 = vpop.f32.mrb[0].mxu0
        %v643 = vadd.f32 0.0, %v642
        %v644 = vpop.f32.mrb[0].mxu0
        %645 = vdwg.mxu0
        %v646 = vadd.f32 %v421, %v568
        %v647 = vadd.f32 %v422, %v573
        %v648 = vadd.f32 %v423, %v578
        %v649 = vadd.f32 %v424, %v583
        %v650 = vadd.f32 %v425, %v588
        %v651 = vadd.f32 %v426, %v593
        %v652 = vadd.f32 %v427, %v598
        %v653 = vadd.f32 %v428, %v603
        %v654 = vadd.f32 %v429, %v608
        %v655 = vadd.f32 %v430, %v613
        %v656 = vadd.f32 %v431, %v618
        %v657 = vadd.f32 %v432, %v623
        %v658 = vadd.f32 %v433, %v628
        %v659 = vadd.f32 %v434, %v633
        %v660 = vadd.f32 %v435, %v638
        %v661 = vadd.f32 %v436, %v643
        %662 = vst [vmem:[#allocation2] sm:$0xff] %v646
        %663 = vst [vmem:[#allocation2 + $0x8] sm:$0xff] %v647
        %664 = vst [vmem:[#allocation2 + $0x10] sm:$0xff] %v648
        %665 = vst [vmem:[#allocation2 + $0x18] sm:$0xff] %v649
        %666 = vst [vmem:[#allocation2 + $0x20] sm:$0xff] %v650
        %667 = vst [vmem:[#allocation2 + $0x28] sm:$0xff] %v651
        %668 = vst [vmem:[#allocation2 + $0x30] sm:$0xff] %v652
        %669 = vst [vmem:[#allocation2 + $0x38] sm:$0xff] %v653
        %670 = vst [vmem:[#allocation2 + $0x40] sm:$0xff] %v654
        %671 = vst [vmem:[#allocation2 + $0x48] sm:$0xff] %v655
        %672 = vst [vmem:[#allocation2 + $0x50] sm:$0xff] %v656
        %673 = vst [vmem:[#allocation2 + $0x58] sm:$0xff] %v657
        %674 = vst [vmem:[#allocation2 + $0x60] sm:$0xff] %v658
        %675 = vst [vmem:[#allocation2 + $0x68] sm:$0xff] %v659
        %676 = vst [vmem:[#allocation2 + $0x70] sm:$0xff] %v660
        %677 = vst [vmem:[#allocation2 + $0x78] sm:$0xff] %v661
        %p678 = scmp.eq.s32.totalorder %s22, 1
        // Predicated region
        $region109: #{model_forward.1} parent=95 // pred_check
          %p679 = pneg %p678
        $region110: #{model_forward.1} parent=95 // pred_check_branch
          %681 = sbr.rel (%p679) target = $region112
        $region111: #{model_forward.1} parent=95 // pred_region
          %v682 = vld [vmem:[#allocation2] sm:$0xff]
          %v683 = vld [vmem:[#allocation2 + $0x8] sm:$0xff]
          %v684 = vld [vmem:[#allocation2 + $0x10] sm:$0xff]
          %v685 = vld [vmem:[#allocation2 + $0x18] sm:$0xff]
          %v686 = vld [vmem:[#allocation2 + $0x20] sm:$0xff]
          %v687 = vld [vmem:[#allocation2 + $0x28] sm:$0xff]
          %v688 = vld [vmem:[#allocation2 + $0x30] sm:$0xff]
          %v689 = vld [vmem:[#allocation2 + $0x38] sm:$0xff]
          %v690 = vld [vmem:[#allocation2 + $0x40] sm:$0xff]
          %v691 = vld [vmem:[#allocation2 + $0x48] sm:$0xff]
          %v692 = vld [vmem:[#allocation2 + $0x50] sm:$0xff]
          %v693 = vld [vmem:[#allocation2 + $0x58] sm:$0xff]
          %v694 = vld [vmem:[#allocation2 + $0x60] sm:$0xff]
          %v695 = vld [vmem:[#allocation2 + $0x68] sm:$0xff]
          %v696 = vld [vmem:[#allocation2 + $0x70] sm:$0xff]
          %v697 = vld [vmem:[#allocation2 + $0x78] sm:$0xff]
          %698 = vst [vmem:[%s395] sm:$0xff] %v682
          %699 = vst [vmem:[%s395 + $0x8] sm:$0xff] %v683
          %700 = vst [vmem:[%s395 + $0x10] sm:$0xff] %v684
          %701 = vst [vmem:[%s395 + $0x18] sm:$0xff] %v685
          %702 = vst [vmem:[%s395 + $0x20] sm:$0xff] %v686
          %703 = vst [vmem:[%s395 + $0x28] sm:$0xff] %v687
          %704 = vst [vmem:[%s395 + $0x30] sm:$0xff] %v688
          %705 = vst [vmem:[%s395 + $0x38] sm:$0xff] %v689
          %706 = vst [vmem:[%s395 + $0x40] sm:$0xff] %v690
          %707 = vst [vmem:[%s395 + $0x48] sm:$0xff] %v691
          %708 = vst [vmem:[%s395 + $0x50] sm:$0xff] %v692
          %709 = vst [vmem:[%s395 + $0x58] sm:$0xff] %v693
          %710 = vst [vmem:[%s395 + $0x60] sm:$0xff] %v694
          %711 = vst [vmem:[%s395 + $0x68] sm:$0xff] %v695
          %712 = vst [vmem:[%s395 + $0x70] sm:$0xff] %v696
          %713 = vst [vmem:[%s395 + $0x78] sm:$0xff] %v697
        $region112: #{model_forward.1} parent=95 // pred_fallthru
          _
        %s714 = sand.u32 %s113, 1
        %s715 = sand.u32 %s113, 1
        %s716 = smul.addr %s715, 128
        %s717 = scalar_lea.vmem [#allocation5], %s716
        // Predicated region
        $region113: #{model_forward.1} parent=95 // pred_check
          %p718 = pneg %p123
        $region114: #{model_forward.1} parent=95 // pred_check_branch
          %720 = sbr.rel (%p718) target = $region116
        $region115: #{model_forward.1} parent=95 // pred_region
          %s721 = smul.u32 %s21, 2
          %s722 = sadd.s32 %s721, %s20
          %s723 = smul.u32 16, %s19
          %s724 = smul.addr %s723, 4
          %s725 = sadd.s32 %s722, %s724
          %s726 = smul.addr %s725, 8
          %s727 = scalar_lea.vmem %s2, %s726
          // Predicated region
          $region117: #{model_forward.1} parent=115 // pred_check
            _
          $region118: #{model_forward.1} parent=115 // pred_check_branch
            %729 = sbr.rel (0) target = $region120
          $region119: #{model_forward.1} parent=115 // pred_region
            // Predicated region
            $region121: #{model_forward.1} parent=119 // pred_check
              _
            $region122: #{model_forward.1} parent=119 // pred_check_branch
              %731 = sbr.rel (0) target = $region124
            $region123: #{model_forward.1} parent=119 // pred_region
              // Predicated region
              $region136: #{model_forward.1} parent=123 // pred_check
                _
              $region137: #{model_forward.1} parent=123 // pred_check_branch
                %776 = sbr.rel (0) target = $region139
              $region138: #{model_forward.1} parent=123 // pred_region
                loop: start=0, step=1, limit=1
                $region140: #{model_forward.1} parent=138 // loop_pre_header
                  _
                $region141: #{model_forward.1} parent=138 // loop_header
                  %s778 = sphi 0, %s782
                  %p779 = scmp.ge.s32.totalorder %s778, 1
                  %s783 = sphi %s717, %s717
                  %s784 = sphi %s727, %s727
                $region142: #{model_forward.1} parent=138 // loop_header_branch
                  %781 = sbr.rel (%p779) target = $region146
                $region143: #{model_forward.1} parent=138 // loop_body
                  %v785 = vld [vmem:[%s783] sm:$0xff]
                  %786 = vst [vmem:[%s784] sm:$0xff] %v785
                  %v787 = vld [vmem:[%s783 + $0x8] sm:$0xff]
                  %788 = vst [vmem:[%s784 + $0x20] sm:$0xff] %v787
                  %v789 = vld [vmem:[%s783 + $0x10] sm:$0xff]
                  %790 = vst [vmem:[%s784 + $0x40] sm:$0xff] %v789
                  %v791 = vld [vmem:[%s783 + $0x18] sm:$0xff]
                  %792 = vst [vmem:[%s784 + $0x60] sm:$0xff] %v791
                  %v793 = vld [vmem:[%s783 + $0x20] sm:$0xff]
                  %794 = vst [vmem:[%s784 + $0x80] sm:$0xff] %v793
                  %v795 = vld [vmem:[%s783 + $0x28] sm:$0xff]
                  %796 = vst [vmem:[%s784 + $0xa0] sm:$0xff] %v795
                  %v797 = vld [vmem:[%s783 + $0x30] sm:$0xff]
                  %798 = vst [vmem:[%s784 + $0xc0] sm:$0xff] %v797
                  %v799 = vld [vmem:[%s783 + $0x38] sm:$0xff]
                  %800 = vst [vmem:[%s784 + $0xe0] sm:$0xff] %v799
                  %v801 = vld [vmem:[%s783 + $0x40] sm:$0xff]
                  %802 = vst [vmem:[%s784 + $0x100] sm:$0xff] %v801
                  %v803 = vld [vmem:[%s783 + $0x48] sm:$0xff]
                  %804 = vst [vmem:[%s784 + $0x120] sm:$0xff] %v803
                  %v805 = vld [vmem:[%s783 + $0x50] sm:$0xff]
                  %806 = vst [vmem:[%s784 + $0x140] sm:$0xff] %v805
                  %v807 = vld [vmem:[%s783 + $0x58] sm:$0xff]
                  %808 = vst [vmem:[%s784 + $0x160] sm:$0xff] %v807
                  %v809 = vld [vmem:[%s783 + $0x60] sm:$0xff]
                  %810 = vst [vmem:[%s784 + $0x180] sm:$0xff] %v809
                  %v811 = vld [vmem:[%s783 + $0x68] sm:$0xff]
                  %812 = vst [vmem:[%s784 + $0x1a0] sm:$0xff] %v811
                  %v813 = vld [vmem:[%s783 + $0x70] sm:$0xff]
                  %814 = vst [vmem:[%s784 + $0x1c0] sm:$0xff] %v813
                  %v815 = vld [vmem:[%s783 + $0x78] sm:$0xff]
                  %816 = vst [vmem:[%s784 + $0x1e0] sm:$0xff] %v815
                $region144: #{model_forward.1} parent=138 // loop_footer
                  %s782 = sadd.s32 1, %s778
                $region145: #{model_forward.1} parent=138 // loop_footer_branch
                  %777 = sbr.rel target = $region141
                $region146: #{model_forward.1} parent=138 // loop_exit
                  _
              $region139: #{model_forward.1} parent=123 // pred_fallthru
                _
              // Predicated region
              $region147: #{model_forward.1} parent=123 // pred_check
                _
              $region148: #{model_forward.1} parent=123 // pred_check_branch
                %818 = sbr.rel target = $region150
              $region149: #{model_forward.1} parent=123 // pred_region
                _
              $region150: #{model_forward.1} parent=123 // pred_fallthru
                _
            $region124: #{model_forward.1} parent=119 // pred_fallthru
              _
            // Predicated region
            $region125: #{model_forward.1} parent=119 // pred_check
              _
            $region126: #{model_forward.1} parent=119 // pred_check_branch
              %733 = sbr.rel target = $region128
            $region127: #{model_forward.1} parent=119 // pred_region
              loop: start=0, step=1, limit=1
              $region129: #{model_forward.1} parent=127 // loop_pre_header
                _
              $region130: #{model_forward.1} parent=127 // loop_header
                %s736 = sphi 0, %s740
                %p737 = scmp.ge.s32.totalorder %s736, 1
                %s741 = sphi %s717, %s717
                %s742 = sphi %s727, %s727
              $region131: #{model_forward.1} parent=127 // loop_header_branch
                %739 = sbr.rel (%p737) target = $region135
              $region132: #{model_forward.1} parent=127 // loop_body
                %v743 = vld [vmem:[%s741] sm:$0xff]
                %744 = vst [vmem:[%s742] sm:$0xff] %v743
                %v745 = vld [vmem:[%s741 + $0x8] sm:$0xff]
                %746 = vst [vmem:[%s742 + $0x20] sm:$0xff] %v745
                %v747 = vld [vmem:[%s741 + $0x10] sm:$0xff]
                %748 = vst [vmem:[%s742 + $0x40] sm:$0xff] %v747
                %v749 = vld [vmem:[%s741 + $0x18] sm:$0xff]
                %750 = vst [vmem:[%s742 + $0x60] sm:$0xff] %v749
                %v751 = vld [vmem:[%s741 + $0x20] sm:$0xff]
                %752 = vst [vmem:[%s742 + $0x80] sm:$0xff] %v751
                %v753 = vld [vmem:[%s741 + $0x28] sm:$0xff]
                %754 = vst [vmem:[%s742 + $0xa0] sm:$0xff] %v753
                %v755 = vld [vmem:[%s741 + $0x30] sm:$0xff]
                %756 = vst [vmem:[%s742 + $0xc0] sm:$0xff] %v755
                %v757 = vld [vmem:[%s741 + $0x38] sm:$0xff]
                %758 = vst [vmem:[%s742 + $0xe0] sm:$0xff] %v757
                %v759 = vld [vmem:[%s741 + $0x40] sm:$0xff]
                %760 = vst [vmem:[%s742 + $0x100] sm:$0xff] %v759
                %v761 = vld [vmem:[%s741 + $0x48] sm:$0xff]
                %762 = vst [vmem:[%s742 + $0x120] sm:$0xff] %v761
                %v763 = vld [vmem:[%s741 + $0x50] sm:$0xff]
                %764 = vst [vmem:[%s742 + $0x140] sm:$0xff] %v763
                %v765 = vld [vmem:[%s741 + $0x58] sm:$0xff]
                %766 = vst [vmem:[%s742 + $0x160] sm:$0xff] %v765
                %v767 = vld [vmem:[%s741 + $0x60] sm:$0xff]
                %768 = vst [vmem:[%s742 + $0x180] sm:$0xff] %v767
                %v769 = vld [vmem:[%s741 + $0x68] sm:$0xff]
                %770 = vst [vmem:[%s742 + $0x1a0] sm:$0xff] %v769
                %v771 = vld [vmem:[%s741 + $0x70] sm:$0xff]
                %772 = vst [vmem:[%s742 + $0x1c0] sm:$0xff] %v771
                %v773 = vld [vmem:[%s741 + $0x78] sm:$0xff]
                %774 = vst [vmem:[%s742 + $0x1e0] sm:$0xff] %v773
              $region133: #{model_forward.1} parent=127 // loop_footer
                %s740 = sadd.s32 1, %s736
              $region134: #{model_forward.1} parent=127 // loop_footer_branch
                %735 = sbr.rel target = $region130
              $region135: #{model_forward.1} parent=127 // loop_exit
                _
            $region128: #{model_forward.1} parent=119 // pred_fallthru
              _
          $region120: #{model_forward.1} parent=115 // pred_fallthru
            _
          %819 = vnop
        $region116: #{model_forward.1} parent=95 // pred_fallthru
          _
      $region96: #{model_forward.1} parent=5 // pred_fallthru
        _
      %p820 = scmp.le.s32.totalorder 2, %s8
      // Predicated region
      $region151: #{model_forward.1} parent=5 // pred_check
        %p821 = pneg %p820
      $region152: #{model_forward.1} parent=5 // pred_check_branch
        %823 = sbr.rel (%p821) target = $region154
      $region153: #{model_forward.1} parent=5 // pred_region
        %s824 = ssub.s32 %s8, 2
        // Predicated region
        $region155: #{model_forward.1} parent=153 // pred_check
          %p825 = pneg %p129
        $region156: #{model_forward.1} parent=153 // pred_check_branch
          %827 = sbr.rel (%p825) target = $region158
        $region157: #{model_forward.1} parent=153 // pred_region
          %s828 = sand.u32 %s114, 1
          %s829 = sand.u32 %s114, 1
          %s830 = smul.addr %s829, 128
          %s831 = scalar_lea.vmem [#allocation5], %s830
        $region158: #{model_forward.1} parent=153 // pred_fallthru
          _
      $region154: #{model_forward.1} parent=5 // pred_fallthru
        _
    $region6: #{model_forward.1} parent=1 // loop_footer
      %s12 = sadd.s32 1, %s8
    $region7: #{model_forward.1} parent=1 // loop_footer_branch
      %7 = sbr.rel target = $region3
    $region8: #{model_forward.1} parent=1 // loop_exit
      _

</llo_original>
